<compile_context>
chip_gen: v5e
topology: v5e:2x2
jax: 0.10.0
libtpu: 0.0.40
codegen_flags: <defaults>
</compile_context>

<pallas_src>
import jax
import jax.numpy as jnp
from jax.experimental import pallas as pl
from jax.experimental.pallas import tpu as pltpu

BN_EPS = 1e-5


def _state_predictor_kernel(x_ref, wih3_t_ref, b3_ref, wfc_t_ref, gb_ref, o_ref):
    # ---- LSTMCell (zero initial state; f-gate already removed from weights) ----
    w_ih = wih3_t_ref[...]                                    # (in_dim, 3H), maybe bf16
    x = x_ref[...].astype(w_ih.dtype)
    gates = jnp.dot(x, w_ih, preferred_element_type=jnp.float32)   # (B, 3H) f32
    gates = gates + b3_ref[...]                               # folded b_ih + b_hh (i,g,o)

    H = gates.shape[1] // 3                                   # hidden size (static)
    i_g = jax.nn.sigmoid(gates[:, 0 * H:1 * H])
    g_g = jnp.tanh(gates[:, 1 * H:2 * H])
    o_g = jax.nn.sigmoid(gates[:, 2 * H:3 * H])

    h1 = o_g * jnp.tanh(i_g * g_g)                            # pred  (c1 = i*g, c0 = 0)

    # ---- fc: Linear (bias dropped — BN mean-subtraction cancels it exactly) ----
    w_fc = wfc_t_ref[...]                                     # (H, repr_dim), maybe bf16
    y = jnp.dot(h1.astype(w_fc.dtype), w_fc, preferred_element_type=jnp.float32)

    # ---- fc: BatchNorm1d (training-mode batch statistics, biased variance) ----
    mean = jnp.mean(y, axis=0, keepdims=True)                 # (1, repr_dim)
    var = jnp.mean((y - mean) ** 2, axis=0, keepdims=True)    # biased variance
    inv_std = jax.lax.rsqrt(var + BN_EPS)
    scale = gb_ref[0:1, :] * inv_std                          # gamma * inv_std
    shift = gb_ref[1:2, :] - mean * scale                     # beta - mean*scale
    o_ref[...] = (y * scale + shift).astype(o_ref.dtype)


def prepare_params(w_ih, b_ih, b_hh, w_fc, b_fc, gamma, beta,
                   matmul_dtype=jnp.bfloat16):
    """One-time parameter prep (keep OUT of the per-call hot path).

    - drops the forget-gate rows of w_ih / biases (dead because c0 == 0)
    - folds b_ih + b_hh into a single (1, 3H) buffer
    - drops b_fc (cancelled by training-mode BatchNorm)
    - pre-transposes weights to (in, out) and casts them to the MXU operand dtype
    - packs gamma/beta into a single (2, repr_dim) buffer
    """
    del b_fc  # mathematically cancelled by the BatchNorm mean subtraction
    H4 = w_ih.shape[0]
    H = H4 // 4                                               # LSTM hidden size
    # PyTorch gate order is (i, f, g, o) — keep i, g, o.
    w_keep = jnp.concatenate([w_ih[0:H], w_ih[2 * H:4 * H]], axis=0)     # (3H, in_dim)
    wih3_t = w_keep.T.astype(matmul_dtype)                               # (in_dim, 3H)

    b = (b_ih + b_hh).astype(jnp.float32)
    b3 = jnp.concatenate([b[0:H], b[2 * H:4 * H]]).reshape(1, 3 * H)     # (1, 3H)

    wfc_t = w_fc.T.astype(matmul_dtype)                                  # (H, repr_dim)
    gb = jnp.stack([gamma, beta], axis=0).astype(jnp.float32)            # (2, repr_dim)
    return wih3_t, b3, wfc_t, gb


@jax.jit
def state_predictor(data, wih3_t, b3, wfc_t, gb):
    """data: (B, 2*repr_dim) float32.  Returns (B, repr_dim) float32."""
    B = data.shape[0]
    repr_dim = wfc_t.shape[1]
    vmem = pl.BlockSpec(memory_space=pltpu.MemorySpace.VMEM)
    return pl.pallas_call(
        _state_predictor_kernel,
        out_shape=jax.ShapeDtypeStruct((B, repr_dim), jnp.float32),
        in_specs=[vmem] * 5,
        out_specs=vmem,
    )(data, wih3_t, b3, wfc_t, gb)


def _reference(data, w_ih, b_ih, b_hh, w_fc, b_fc, gamma, beta):
    """Pure-f32 reference matching torch StatePredictor.forward (training mode)."""
    gates = data @ w_ih.T + b_ih + b_hh
    H = gates.shape[1] // 4
    i = jax.nn.sigmoid(gates[:, 0 * H:1 * H])
    g = jnp.tanh(gates[:, 2 * H:3 * H])
    o = jax.nn.sigmoid(gates[:, 3 * H:4 * H])
    h1 = o * jnp.tanh(i * g)                                  # c0 = 0 -> f-gate dead
    y = h1 @ w_fc.T + b_fc
    mean = jnp.mean(y, axis=0, keepdims=True)
    var = jnp.mean((y - mean) ** 2, axis=0, keepdims=True)
    return (y - mean) / jnp.sqrt(var + BN_EPS) * gamma + beta


if __name__ == "__main__":
    # Small shapes consistent with the module: repr_dim=32 ->
    # LSTMCell(64, 128), Linear(128, 32), BatchNorm1d(32); batch=8.
    repr_dim = 32
    in_dim = repr_dim * 2        # 64
    hidden = repr_dim * 4        # 128
    batch = 8

    key = jax.random.PRNGKey(0)
    k = jax.random.split(key, 6)
    lstm_scale = 1.0 / jnp.sqrt(hidden)
    fc_scale = 1.0 / jnp.sqrt(hidden)

    data = jax.random.normal(k[0], (batch, in_dim), jnp.float32)
    w_ih = jax.random.uniform(k[1], (4 * hidden, in_dim), jnp.float32,
                              -lstm_scale, lstm_scale)
    b_ih = jax.random.uniform(k[2], (4 * hidden,), jnp.float32,
                              -lstm_scale, lstm_scale)
    b_hh = jax.random.uniform(k[3], (4 * hidden,), jnp.float32,
                              -lstm_scale, lstm_scale)
    w_fc = jax.random.uniform(k[4], (repr_dim, hidden), jnp.float32,
                              -fc_scale, fc_scale)
    b_fc = jax.random.uniform(k[5], (repr_dim,), jnp.float32,
                              -fc_scale, fc_scale)
    gamma = jnp.ones((repr_dim,), jnp.float32)   # BatchNorm1d weight init
    beta = jnp.zeros((repr_dim,), jnp.float32)   # BatchNorm1d bias init

    ref = _reference(data, w_ih, b_ih, b_hh, w_fc, b_fc, gamma, beta)

    # Exact-math path (f32 MXU operands): must match the reference tightly.
    params_f32 = prepare_params(w_ih, b_ih, b_hh, w_fc, b_fc, gamma, beta,
                                matmul_dtype=jnp.float32)
    out_f32 = jax.block_until_ready(state_predictor(data, *params_f32))
    assert out_f32.shape == (batch, repr_dim)
    assert jnp.allclose(out_f32, ref, atol=1e-4, rtol=1e-4), "f32 mismatch vs reference"

    # Fast path (bf16 MXU operands, f32 accumulation / elementwise): looser check.
    params_bf16 = prepare_params(w_ih, b_ih, b_hh, w_fc, b_fc, gamma, beta,
                                 matmul_dtype=jnp.bfloat16)
    out_bf16 = jax.block_until_ready(state_predictor(data, *params_bf16))
    assert out_bf16.shape == (batch, repr_dim)
    assert jnp.allclose(out_bf16, ref, atol=3e-2, rtol=3e-2), "bf16 mismatch vs reference"

    print("KERNEL_OK")
</pallas_src>

<mosaic_0001>
module attributes {stable_mosaic.version = 11 : i64} {
  func.func @_state_predictor_kernel(%arg0: memref<8x64xf32, #tpu.memory_space<vmem>>, %arg1: memref<64x384xf32, #tpu.memory_space<vmem>>, %arg2: memref<1x384xf32, #tpu.memory_space<vmem>>, %arg3: memref<128x32xf32, #tpu.memory_space<vmem>>, %arg4: memref<2x32xf32, #tpu.memory_space<vmem>>, %arg5: memref<8x32xf32, #tpu.memory_space<vmem>>) attributes {dimension_semantics = [], scalar_prefetch = 0 : i64, scratch_operands = 0 : i64, tpu.core_type = #tpu.core_type<tc>} {
    %c0 = arith.constant 0 : index
    %c0_0 = arith.constant 0 : index
    %0 = vector.load %arg1[%c0, %c0_0] : memref<64x384xf32, #tpu.memory_space<vmem>>, vector<64x384xf32>
    %c0_1 = arith.constant 0 : index
    %c0_2 = arith.constant 0 : index
    %1 = vector.load %arg0[%c0_1, %c0_2] : memref<8x64xf32, #tpu.memory_space<vmem>>, vector<8x64xf32>
    %cst = arith.constant dense<0.000000e+00> : vector<8x384xf32>
    %2 = tpu.matmul %1, %0, %cst {dimension_numbers = #tpu.dot_dimension_numbers<[1], [0], [0], [1], [0, 0, 1, 1], [], []>} : vector<8x64xf32>, vector<64x384xf32>, vector<8x384xf32> -> vector<8x384xf32>
    %c0_3 = arith.constant 0 : index
    %c0_4 = arith.constant 0 : index
    %3 = vector.load %arg2[%c0_3, %c0_4] : memref<1x384xf32, #tpu.memory_space<vmem>>, vector<1x384xf32>
    %4 = vector.broadcast %3 : vector<1x384xf32> to vector<8x384xf32>
    %5 = arith.addf %2, %4 : vector<8x384xf32>
    %6 = vector.extract_strided_slice %5 {offsets = [0, 0], sizes = [8, 128], strides = [1, 1]} : vector<8x384xf32> to vector<8x128xf32>
    %7 = arith.negf %6 : vector<8x128xf32>
    %8 = math.exp %7 : vector<8x128xf32>
    %cst_5 = arith.constant 1.000000e+00 : f32
    %9 = vector.broadcast %cst_5 : f32 to vector<8x128xf32>
    %10 = arith.addf %9, %8 : vector<8x128xf32>
    %11 = arith.divf %9, %10 : vector<8x128xf32>
    %12 = vector.extract_strided_slice %5 {offsets = [0, 128], sizes = [8, 128], strides = [1, 1]} : vector<8x384xf32> to vector<8x128xf32>
    %13 = math.tanh %12 : vector<8x128xf32>
    %14 = vector.extract_strided_slice %5 {offsets = [0, 256], sizes = [8, 128], strides = [1, 1]} : vector<8x384xf32> to vector<8x128xf32>
    %15 = arith.negf %14 : vector<8x128xf32>
    %16 = math.exp %15 : vector<8x128xf32>
    %cst_6 = arith.constant 1.000000e+00 : f32
    %17 = vector.broadcast %cst_6 : f32 to vector<8x128xf32>
    %18 = arith.addf %17, %16 : vector<8x128xf32>
    %19 = arith.divf %17, %18 : vector<8x128xf32>
    %20 = arith.mulf %11, %13 : vector<8x128xf32>
    %21 = math.tanh %20 : vector<8x128xf32>
    %22 = arith.mulf %19, %21 : vector<8x128xf32>
    %c0_7 = arith.constant 0 : index
    %c0_8 = arith.constant 0 : index
    %23 = vector.load %arg3[%c0_7, %c0_8] : memref<128x32xf32, #tpu.memory_space<vmem>>, vector<128x32xf32>
    %cst_9 = arith.constant dense<0.000000e+00> : vector<8x32xf32>
    %24 = tpu.matmul %22, %23, %cst_9 {dimension_numbers = #tpu.dot_dimension_numbers<[1], [0], [0], [1], [0, 0, 1, 1], [], []>} : vector<8x128xf32>, vector<128x32xf32>, vector<8x32xf32> -> vector<8x32xf32>
    %cst_10 = arith.constant dense<0.000000e+00> : vector<32xf32>
    %25 = vector.multi_reduction <add>, %24, %cst_10 [0] : vector<8x32xf32> to vector<32xf32>
    %26 = vector.shape_cast %25 : vector<32xf32> to vector<1x32xf32>
    %cst_11 = arith.constant 8.000000e+00 : f32
    %27 = vector.broadcast %cst_11 : f32 to vector<1x32xf32>
    %28 = arith.divf %26, %27 : vector<1x32xf32>
    %29 = vector.broadcast %28 : vector<1x32xf32> to vector<8x32xf32>
    %30 = arith.subf %24, %29 : vector<8x32xf32>
    %31 = arith.mulf %30, %30 : vector<8x32xf32>
    %cst_12 = arith.constant dense<0.000000e+00> : vector<32xf32>
    %32 = vector.multi_reduction <add>, %31, %cst_12 [0] : vector<8x32xf32> to vector<32xf32>
    %33 = vector.shape_cast %32 : vector<32xf32> to vector<1x32xf32>
    %cst_13 = arith.constant 8.000000e+00 : f32
    %34 = vector.broadcast %cst_13 : f32 to vector<1x32xf32>
    %35 = arith.divf %33, %34 : vector<1x32xf32>
    %cst_14 = arith.constant 9.99999974E-6 : f32
    %36 = vector.broadcast %cst_14 : f32 to vector<1x32xf32>
    %37 = arith.addf %35, %36 : vector<1x32xf32>
    %38 = math.rsqrt %37 : vector<1x32xf32>
    %c0_15 = arith.constant 0 : index
    %c0_16 = arith.constant 0 : index
    %39 = vector.load %arg4[%c0_15, %c0_16] : memref<2x32xf32, #tpu.memory_space<vmem>>, vector<1x32xf32>
    %40 = arith.mulf %39, %38 : vector<1x32xf32>
    %c1 = arith.constant 1 : index
    %c0_17 = arith.constant 0 : index
    %41 = vector.load %arg4[%c1, %c0_17] : memref<2x32xf32, #tpu.memory_space<vmem>>, vector<1x32xf32>
    %42 = arith.mulf %28, %40 : vector<1x32xf32>
    %43 = arith.subf %41, %42 : vector<1x32xf32>
    %44 = vector.broadcast %40 : vector<1x32xf32> to vector<8x32xf32>
    %45 = arith.mulf %24, %44 : vector<8x32xf32>
    %46 = vector.broadcast %43 : vector<1x32xf32> to vector<8x32xf32>
    %47 = arith.addf %45, %46 : vector<8x32xf32>
    %c0_18 = arith.constant 0 : index
    %c0_19 = arith.constant 0 : index
    %48 = vector.load %arg5[%c0_18, %c0_19] : memref<8x32xf32, #tpu.memory_space<vmem>>, vector<8x32xf32>
    tpu.vector_store %arg5[%c0_18, %c0_19], %47 {strides = array<i32>} : memref<8x32xf32, #tpu.memory_space<vmem>>, vector<8x32xf32>,
    return
  }
}

</mosaic_0001>

<llo_original>
// kernel: state_predictor.1
$region0: #{state_predictor.1}
  #allocation0 [shape = 'u32[]', space=smem, size = 0x4, offset = 0x4, fixed_abs, tag = 'smem constant byte address 0x4 - core index']
  #allocation1 [shape = 'u32[72,128]{1,0:T(1,128)}', space=vmem, size = 0x9000, scoped, tag = 'internal scratch']
  %s0 = inlined_call_operand.vmem [shape: f32[8,64], index: 0, kind: input, shape index: {}]
  %s1 = inlined_call_operand.hbm [shape: f32[64,384], index: 1, kind: input, shape index: {}]
  %s2 = inlined_call_operand.vmem [shape: f32[1,384], index: 2, kind: input, shape index: {}]
  %s3 = inlined_call_operand.vmem [shape: f32[128,32], index: 3, kind: input, shape index: {}]
  %s4 = inlined_call_operand.vmem [shape: f32[2,32], index: 4, kind: input, shape index: {}]
  %s5 = inlined_call_operand.hbm [shape: f32[8,32], index: 5, kind: output, shape index: {}]
  %s6 = sld [smem:[#allocation0]]
  $region34: #{state_predictor.1} parent=0
    _
  %s8 = ssub.s32 1, %s6
  %s9 = scalar_select 0, %s8, %s6
  $region1: #{state_predictor.1} parent=0
    #allocation2 [shape = 'u8[98304]{0}', space=vmem, size = 0x18000, scoped, tag = 'input window, operand 1, single buffered']
    #allocation3 [shape = 's32[1]{0}', space=sflag, size = 0x4, scoped, tag = 'scoped memory for state_predictor.1']
    #allocation4 [shape = 's32[1]{0}', space=sflag, size = 0x4, scoped, tag = 'scoped memory for state_predictor.1']
    #allocation5 [shape = 'u8[4096]{0}', space=vmem, size = 0x1000, scoped, tag = 'output window, operand 0, single buffered']
    %10 = vsyncpa [#allocation3], 0
    %11 = vsyncpa [#allocation4], 0
    // Predicated region
    $region2: #{state_predictor.1} parent=1 // pred_check
      _
    $region3: #{state_predictor.1} parent=1 // pred_check_branch
      %13 = sbr.rel (0) target = $region5
    $region4: #{state_predictor.1} parent=1 // pred_region
      _
    $region5: #{state_predictor.1} parent=1 // pred_fallthru
      _
    // Predicated region
    $region6: #{state_predictor.1} parent=1 // pred_check
      _
    $region7: #{state_predictor.1} parent=1 // pred_check_branch
      %15 = sbr.rel (0) target = $region9
    $region8: #{state_predictor.1} parent=1 // pred_region
      %17 = vsyncadd [#allocation3], 0
      %s18 = sshll.u32 %s1, 4
      %s19 = int_to_ptr.hbm [resolvable:$true] %s18
      %s20 = sshll.u32 [#allocation2], 4
      %s21 = int_to_ptr.vmem [resolvable:$true] %s20
      %26 = dma.hbm_to_vmem [thread:$0]  %s19, 3072, %s21, [#allocation3], 384, 384, 24
    $region9: #{state_predictor.1} parent=1 // pred_fallthru
      _
    // Predicated region
    $region10: #{state_predictor.1} parent=1 // pred_check
      _
    $region11: #{state_predictor.1} parent=1 // pred_check_branch
      %28 = sbr.rel (0) target = $region13
    $region12: #{state_predictor.1} parent=1 // pred_region
      _
    $region13: #{state_predictor.1} parent=1 // pred_fallthru
      _
    // Predicated region
    $region14: #{state_predictor.1} parent=1 // pred_check
      _
    $region15: #{state_predictor.1} parent=1 // pred_check_branch
      %30 = sbr.rel (0) target = $region17
    $region16: #{state_predictor.1} parent=1 // pred_region
      _
    $region17: #{state_predictor.1} parent=1 // pred_fallthru
      _
    // Predicated region
    $region18: #{state_predictor.1} parent=1 // pred_check
      _
    $region19: #{state_predictor.1} parent=1 // pred_check_branch
      %32 = sbr.rel (0) target = $region21
    $region20: #{state_predictor.1} parent=1 // pred_region
      _
    $region21: #{state_predictor.1} parent=1 // pred_fallthru
      _
    // Predicated region
    $region22: #{state_predictor.1} parent=1 // pred_check
      _
    $region23: #{state_predictor.1} parent=1 // pred_check_branch
      %34 = sbr.rel (0) target = $region25
    $region24: #{state_predictor.1} parent=1 // pred_region
      %36 = dma.done [#allocation3], 3072
    $region25: #{state_predictor.1} parent=1 // pred_fallthru
      _
    %v37 = vld [vmem:[#allocation2] sm:$0xff]
    %v38 = vld [vmem:[#allocation2 + $0x8] sm:$0xff]
    %v39 = vld [vmem:[#allocation2 + $0x10] sm:$0xff]
    %v40 = vld [vmem:[#allocation2 + $0x18] sm:$0xff]
    %v41 = vld [vmem:[#allocation2 + $0x20] sm:$0xff]
    %v42 = vld [vmem:[#allocation2 + $0x28] sm:$0xff]
    %v43 = vld [vmem:[#allocation2 + $0x30] sm:$0xff]
    %v44 = vld [vmem:[#allocation2 + $0x38] sm:$0xff]
    %v45 = vld [vmem:[#allocation2 + $0x40] sm:$0xff]
    %v46 = vld [vmem:[#allocation2 + $0x48] sm:$0xff]
    %v47 = vld [vmem:[#allocation2 + $0x50] sm:$0xff]
    %v48 = vld [vmem:[#allocation2 + $0x58] sm:$0xff]
    %v49 = vld [vmem:[#allocation2 + $0x60] sm:$0xff]
    %v50 = vld [vmem:[#allocation2 + $0x68] sm:$0xff]
    %v51 = vld [vmem:[#allocation2 + $0x70] sm:$0xff]
    %v52 = vld [vmem:[#allocation2 + $0x78] sm:$0xff]
    %v53 = vld [vmem:[#allocation2 + $0x80] sm:$0xff]
    %v54 = vld [vmem:[#allocation2 + $0x88] sm:$0xff]
    %v55 = vld [vmem:[#allocation2 + $0x90] sm:$0xff]
    %v56 = vld [vmem:[#allocation2 + $0x98] sm:$0xff]
    %v57 = vld [vmem:[#allocation2 + $0xa0] sm:$0xff]
    %v58 = vld [vmem:[#allocation2 + $0xa8] sm:$0xff]
    %v59 = vld [vmem:[#allocation2 + $0xb0] sm:$0xff]
    %v60 = vld [vmem:[#allocation2 + $0xb8] sm:$0xff]
    %v61 = vld [vmem:[%s0] sm:$0xff]
    %v62 = vld [vmem:[%s2] sm:$0x7]
    %v64 = vperm.slane %v62, 0
    %v65 = vperm.slane %v62, 1
    %v66 = vperm.slane %v62, 2
    %vm70 = vcmask 523264
    %v72 = vsel %vm70, %v61, 0
    %74 = vmatpush.msra.mxu0 0.0
    %75 = vmatpush.msra.mxu0 0.0
    %76 = vmatpush.msra.mxu0 0.0
    %77 = vmatpush.msra.mxu0 0.0
    %78 = vmatpush.msra.mxu0 0.0
    %79 = vmatpush.msra.mxu0 0.0
    %80 = vmatpush.msra.mxu0 0.0
    %81 = vmatpush.msra.mxu0 0.0
    %82 = vmatpush.msra.mxu0 %v58
    %83 = vmatpush.msra.mxu0 %v55
    %84 = vmatpush.msra.mxu0 %v52
    %85 = vmatpush.msra.mxu0 %v49
    %86 = vmatpush.msra.mxu0 %v46
    %87 = vmatpush.msra.mxu0 %v43
    %88 = vmatpush.msra.mxu0 %v40
    %89 = vmatpush.msra.mxu0 %v37
    %90 = vmatmul.f32.gmra.mxu0 %v72
    %v91 = vpop.f32.mrf.mxu0
    %v92 = vadd.f32 %v64, %v91
    %93 = vdwg.mxu0
    %94 = vmatpush.msra.mxu0 0.0
    %95 = vmatpush.msra.mxu0 0.0
    %96 = vmatpush.msra.mxu0 0.0
    %97 = vmatpush.msra.mxu0 0.0
    %98 = vmatpush.msra.mxu0 0.0
    %99 = vmatpush.msra.mxu0 0.0
    %100 = vmatpush.msra.mxu0 0.0
    %101 = vmatpush.msra.mxu0 0.0
    %102 = vmatpush.msra.mxu0 %v59
    %103 = vmatpush.msra.mxu0 %v56
    %104 = vmatpush.msra.mxu0 %v53
    %105 = vmatpush.msra.mxu0 %v50
    %106 = vmatpush.msra.mxu0 %v47
    %107 = vmatpush.msra.mxu0 %v44
    %108 = vmatpush.msra.mxu0 %v41
    %109 = vmatpush.msra.mxu0 %v38
    %110 = vmatmul.f32.gmra.mxu0 %v72
    %v111 = vpop.f32.mrf.mxu0
    %v112 = vadd.f32 %v65, %v111
    %113 = vdwg.mxu0
    %114 = vmatpush.msra.mxu0 0.0
    %115 = vmatpush.msra.mxu0 0.0
    %116 = vmatpush.msra.mxu0 0.0
    %117 = vmatpush.msra.mxu0 0.0
    %118 = vmatpush.msra.mxu0 0.0
    %119 = vmatpush.msra.mxu0 0.0
    %120 = vmatpush.msra.mxu0 0.0
    %121 = vmatpush.msra.mxu0 0.0
    %122 = vmatpush.msra.mxu0 %v60
    %123 = vmatpush.msra.mxu0 %v57
    %124 = vmatpush.msra.mxu0 %v54
    %125 = vmatpush.msra.mxu0 %v51
    %126 = vmatpush.msra.mxu0 %v48
    %127 = vmatpush.msra.mxu0 %v45
    %128 = vmatpush.msra.mxu0 %v42
    %129 = vmatpush.msra.mxu0 %v39
    %130 = vmatmul.f32.gmra.mxu0 %v72
    %v131 = vpop.f32.mrf.mxu0
    %v132 = vadd.f32 %v66, %v131
    %133 = vdwg.mxu0
    %v134 = vxor.u32 %v92, 2147483648
    %v135 = vmul.f32 %v134, 1.442695
    %v136 = vpow.pop %v135
    %v137 = vadd.f32 %v136, 1.0
    %v138 = vrcp.pop %v137
    %v139 = vmul.f32 %v137, %v138
    %v140 = vsub.f32 1.0, %v139
    %v141 = vmul.f32 %v138, %v140
    %v142 = vadd.f32 %v138, %v141
    %vm143 = vweird.f32 %v137
    %vm144 = vweird.f32 %v138
    %vm145 = vmor %vm143, %vm144
    %v146 = vsel %vm145, %v138, %v142
    %v147 = vand.u32 2147483647, %v137
    %vm148 = vcmp.eq.f32.partialorder %v147, 8.507059e+37
    %v149 = vand.u32 %v137, 2147483648
    %v150 = vor.u32 1.1754944e-38, %v149
    %v151 = vsel %vm148, %v150, %v146
    %v152 = vmul.f32 1.0, %v151
    %v153 = vtanh.pop %v112
    %v154 = vxor.u32 %v132, 2147483648
    %v155 = vmul.f32 %v154, 1.442695
    %v156 = vpow.pop %v155
    %v157 = vadd.f32 %v156, 1.0
    %v158 = vrcp.pop %v157
    %v159 = vmul.f32 %v157, %v158
    %v160 = vsub.f32 1.0, %v159
    %v161 = vmul.f32 %v158, %v160
    %v162 = vadd.f32 %v158, %v161
    %vm163 = vweird.f32 %v157
    %vm164 = vweird.f32 %v158
    %vm165 = vmor %vm163, %vm164
    %v166 = vsel %vm165, %v158, %v162
    %v167 = vand.u32 2147483647, %v157
    %vm168 = vcmp.eq.f32.partialorder %v167, 8.507059e+37
    %v169 = vand.u32 %v157, 2147483648
    %v170 = vor.u32 1.1754944e-38, %v169
    %v171 = vsel %vm168, %v170, %v166
    %v172 = vmul.f32 1.0, %v171
    %v173 = vmul.f32 %v152, %v153
    %v174 = vtanh.pop %v173
    %v175 = vmul.f32 %v172, %v174
    %v176 = vld [vmem:[%s3] sm:$0xff]
    %v177 = vld [vmem:[%s3 + $0x8] sm:$0xff]
    %v178 = vld [vmem:[%s3 + $0x10] sm:$0xff]
    %v179 = vld [vmem:[%s3 + $0x18] sm:$0xff]
    %v180 = vld [vmem:[%s3 + $0x20] sm:$0xff]
    %v181 = vld [vmem:[%s3 + $0x28] sm:$0xff]
    %v182 = vld [vmem:[%s3 + $0x30] sm:$0xff]
    %v183 = vld [vmem:[%s3 + $0x38] sm:$0xff]
    %v184 = vld [vmem:[%s3 + $0x40] sm:$0xff]
    %v185 = vld [vmem:[%s3 + $0x48] sm:$0xff]
    %v186 = vld [vmem:[%s3 + $0x50] sm:$0xff]
    %v187 = vld [vmem:[%s3 + $0x58] sm:$0xff]
    %v188 = vld [vmem:[%s3 + $0x60] sm:$0xff]
    %v189 = vld [vmem:[%s3 + $0x68] sm:$0xff]
    %v190 = vld [vmem:[%s3 + $0x70] sm:$0xff]
    %v191 = vld [vmem:[%s3 + $0x78] sm:$0xff]
    %192 = vmatpush.msra.mxu0 %v191
    %193 = vmatpush.msra.mxu0 %v190
    %194 = vmatpush.msra.mxu0 %v189
    %195 = vmatpush.msra.mxu0 %v188
    %196 = vmatpush.msra.mxu0 %v187
    %197 = vmatpush.msra.mxu0 %v186
    %198 = vmatpush.msra.mxu0 %v185
    %199 = vmatpush.msra.mxu0 %v184
    %200 = vmatpush.msra.mxu0 %v183
    %201 = vmatpush.msra.mxu0 %v182
    %202 = vmatpush.msra.mxu0 %v181
    %203 = vmatpush.msra.mxu0 %v180
    %204 = vmatpush.msra.mxu0 %v179
    %205 = vmatpush.msra.mxu0 %v178
    %206 = vmatpush.msra.mxu0 %v177
    %207 = vmatpush.msra.mxu0 %v176
    %208 = vmatmul.f32.gmra.mxu0 %v175
    %v209 = vpop.f32.mrf.mxu0
    %v210 = vadd.f32 0.0, %v209
    %211 = vdwg.mxu0
    %vm212 = vcmask 261120
    %v213 = vsel %vm212, %v210, 0.0
    %v214 = vrot.slane %v213, 4
    %v215 = vadd.f32 %v213, %v214
    %v216 = vrot.slane %v215, 2
    %v217 = vadd.f32 %v215, %v216
    %v218 = vrot.slane %v217, 1
    %v219 = vadd.f32 %v217, %v218
    %v220 = vrcp.pop 8.0
    %v221 = vmul.f32 8.0, %v220
    %v222 = vsub.f32 1.0, %v221
    %v223 = vmul.f32 %v220, %v222
    %v224 = vadd.f32 %v220, %v223
    %vm225 = vweird.f32 %v220
    %v226 = vsel %vm225, %v220, %v224
    %v227 = vmul.f32 %v219, %v226
    %v228 = vsub.f32 %v210, %v227
    %v229 = vmul.f32 %v228, %v228
    %v230 = vsel %vm212, %v229, 0.0
    %v231 = vrot.slane %v230, 4
    %v232 = vadd.f32 %v230, %v231
    %v233 = vrot.slane %v232, 2
    %v234 = vadd.f32 %v232, %v233
    %v235 = vrot.slane %v234, 1
    %v236 = vadd.f32 %v234, %v235
    %v237 = vmul.f32 %v236, %v226
    %v238 = vadd.f32 %v237, 1e-05
    %v239 = vrsqrt.pop %v238
    %v240 = vmul.f32 %v239, %v238
    %v241 = vmul.f32 %v240, %v239
    %v242 = vmul.f32 0.5, %v241
    %v243 = vsub.f32 1.5, %v242
    %v244 = vmul.f32 %v239, %v243
    %vm245 = vweird.f32 %v238
    %vm246 = vweird.f32 %v239
    %vm247 = vmor %vm245, %vm246
    %v248 = vsel %vm247, %v239, %v244
    %v249 = vld [vmem:[%s4] sm:$0x1]
    %v250 = vmul.f32 %v249, %v248
    %v251 = vld [vmem:[%s4 + $0x1] sm:$0x1]
    %v252 = vmul.f32 %v227, %v250
    %v253 = vsub.f32 %v251, %v252
    %v254 = vperm.slane %v250, 0
    %v255 = vmul.f32 %v210, %v254
    %v256 = vperm.slane %v253, 0
    %v257 = vadd.f32 %v255, %v256
    %258 = vst.msk [vmem:[#allocation5] sm:$0xff] %vm212, %v257
    // Predicated region
    $region26: #{state_predictor.1} parent=1 // pred_check
      _
    $region27: #{state_predictor.1} parent=1 // pred_check_branch
      %260 = sbr.rel (0) target = $region29
    $region28: #{state_predictor.1} parent=1 // pred_region
      %262 = vsyncadd [#allocation4], 0
      %s264 = sshll.u32 [#allocation5], 4
      %s265 = int_to_ptr.vmem [resolvable:$true] %s264
      %s266 = sshll.u32 %s5, 4
      %s267 = int_to_ptr.hbm [resolvable:$true] %s266
      %269 = dma.vmem_to_hbm [thread:$0]  %s265, 128, %s267, [#allocation4]
    $region29: #{state_predictor.1} parent=1 // pred_fallthru
      _
    // Predicated region
    $region30: #{state_predictor.1} parent=1 // pred_check
      _
    $region31: #{state_predictor.1} parent=1 // pred_check_branch
      %271 = sbr.rel (0) target = $region33
    $region32: #{state_predictor.1} parent=1 // pred_region
      %273 = dma.done [#allocation4], 128
    $region33: #{state_predictor.1} parent=1 // pred_fallthru
      _
    %274 = vsyncpa [#allocation3], 1
    %275 = vsyncpa [#allocation4], 1

</llo_original>
